<compile_context>
chip_gen: v6e
topology: v6e:2x2x1
jax: 0.10.0
libtpu: 0.0.40
codegen_flags: <defaults>
</compile_context>

<pallas_src>
import functools

import jax
import jax.numpy as jnp
from jax.experimental import pallas as pl
from jax.experimental.pallas import tpu as pltpu


def _round_up(x, m):
    return ((x + m - 1) // m) * m


def _plan_tiles(n, row_tile, key_tile):
    """Pick (Np, TQ, TK): Np padded node count, TQ row tile, TK key tile."""
    # Key tile: multiple of 128 lanes; Np a multiple of TK.
    np_pad = _round_up(n, 128)
    if np_pad <= key_tile:
        tk = np_pad
    else:
        tk = _round_up(key_tile, 128)
        np_pad = _round_up(n, tk)
    # Row tile: multiple of 32 (int8 sublane packing), divides Np, and gives
    # >= ~8 row-grid steps so the DMA pipeline (and v7x 2-TC sharding) has work.
    tq_target = min(row_tile, max(32, _round_up(-(-n // 8), 32)))
    tq = 32
    while tq * 2 <= tq_target and np_pad % (tq * 2) == 0:
        tq *= 2
    return np_pad, tq, tk


def _vmem_limit(nbytes):
    # Floor 32 MiB (above all default scoped limits), cap 64 MiB (v7x physical).
    return int(min(64 * 1024 * 1024, max(32 * 1024 * 1024, nbytes)))


# ---------------------------------------------------------------------------
# Kernel A: Wh = h @ W (MXU), plus the two attention-vector projections as
# cross-lane reductions (XLU) instead of 1-lane-wide matmuls.
# ---------------------------------------------------------------------------
def _project_kernel(h_ref, w_ref, a1_ref, a2_ref, wh_ref, wh1_ref, wh2_ref):
    wh = jnp.dot(h_ref[...], w_ref[...], preferred_element_type=jnp.float32)
    wh_ref[...] = wh.astype(wh_ref.dtype)
    # wh1 = Wh @ a1, wh2 = Wh @ a2 -- lane reductions (XLU), f32 stats.
    wh1_ref[...] = jnp.sum(wh * a1_ref[...], axis=-1, keepdims=True)
    wh2_ref[...] = jnp.sum(wh * a2_ref[...], axis=-1, keepdims=True)


# ---------------------------------------------------------------------------
# Kernel B: (row-block, key-block) online-softmax attention + aggregation.
#   logits = mask(leaky_relu(wh1 + wh2t))
#   online softmax over key blocks, un-normalized p @ Wh accumulated in f32,
#   normalize + optional ELU on the last key block.
# ---------------------------------------------------------------------------
def _attention_kernel(wh1_ref, wh2t_ref, adj_ref, wh_ref, o_ref,
                      m_sc, l_sc, acc_sc, *,
                      alpha, concat, has_col_padding, ew_dtype):
    k = pl.program_id(1)

    @pl.when(k == 0)
    def _init():
        m_sc[...] = jnp.full_like(m_sc, -jnp.inf)
        l_sc[...] = jnp.zeros_like(l_sc)
        acc_sc[...] = jnp.zeros_like(acc_sc)

    adj = adj_ref[...]                                # (TQ, TK) int8 -- no upcast

    # Per-(q,k) logits: leaky_relu(Wh1 + Wh2.T), then adjacency mask.
    wh1 = wh1_ref[...].astype(ew_dtype)               # (TQ, 1)
    wh2t = wh2t_ref[...].astype(ew_dtype)             # (1, TK)
    e = wh1 + wh2t
    e = jnp.where(e >= 0, e, jnp.asarray(alpha, ew_dtype) * e)
    logits = jnp.where(adj > 0, e, jnp.asarray(-2.0 ** 31, ew_dtype))
    if has_col_padding:
        # Padded (fake) key columns are marked adj == -1: push far below -2**31
        # so fully-isolated real rows still softmax over real columns only.
        logits = jnp.where(adj < 0, jnp.asarray(-3.0e38, ew_dtype), logits)

    # Online softmax update; row stats kept in f32.
    m_prev = m_sc[...]
    m_blk = jnp.max(logits, axis=-1, keepdims=True).astype(jnp.float32)
    m_new = jnp.maximum(m_prev, m_blk)
    corr = jnp.exp(m_prev - m_new)                    # (TQ, 1) f32, EUP
    p = jnp.exp(logits - m_new.astype(ew_dtype))      # (TQ, TK) ew_dtype, EUP
    l_sc[...] = corr * l_sc[...] + jnp.sum(
        p, axis=-1, keepdims=True).astype(jnp.float32)
    # Deferred normalization: accumulate un-normalized p @ Wh, divide once at
    # finalize -- removes the per-(q,k) normalize multiply from the VPU chain.
    acc_sc[...] = corr * acc_sc[...] + jnp.dot(
        p.astype(wh_ref.dtype), wh_ref[...], preferred_element_type=jnp.float32)
    m_sc[...] = m_new

    @pl.when(k == pl.num_programs(1) - 1)
    def _finalize():
        out = acc_sc[...] * pl.reciprocal(l_sc[...], approx=True)
        if concat:
            # ELU (default alpha = 1.0)
            out = jnp.where(out > 0.0, out, jnp.expm1(out))
        o_ref[...] = out.astype(o_ref.dtype)


# ---------------------------------------------------------------------------
# Wrapper
# ---------------------------------------------------------------------------
def gat_layer(h, adj, W, a, *, alpha=0.2, concat=True, use_bf16=True,
              ew_bf16=False, row_tile=128, key_tile=1024):
    """Pallas GAT layer forward.

    h: (N, Fin), adj: (N, N) (only sign of entries used), W: (Fin, Fout),
    a: (2*Fout, 1). Returns (N, Fout) float32.
    """
    N, Fin = h.shape
    Fout = W.shape[1]
    assert adj.shape == (N, N)
    assert a.shape == (2 * Fout, 1)

    f32 = jnp.float32
    mm_dtype = jnp.bfloat16 if use_bf16 else f32     # MXU operand dtype
    ew_dtype = jnp.bfloat16 if ew_bf16 else f32      # elementwise chain dtype
    mm_bytes = 2 if use_bf16 else 4
    ew_bytes = 2 if ew_bf16 else 4

    # Lane-dense output: pad Fout up to a multiple of 128.
    Fp = _round_up(Fout, 128)
    Np, TQ, TK = _plan_tiles(N, row_tile, key_tile)
    grid_rows = Np // TQ
    grid_keys = Np // TK
    has_pad = Np != N

    # Pad / cast inputs (wrapper-side layout plumbing).
    h_p = jnp.zeros((Np, Fin), mm_dtype).at[:N, :].set(h.astype(mm_dtype))
    W_p = jnp.zeros((Fin, Fp), mm_dtype).at[:, :Fout].set(W.astype(mm_dtype))
    a1 = jnp.zeros((1, Fp), f32).at[0, :Fout].set(a[:Fout, 0].astype(f32))
    a2 = jnp.zeros((1, Fp), f32).at[0, :Fout].set(a[Fout:, 0].astype(f32))
    # adjacency as int8: 1 = edge, 0 = no edge, -1 = padded row/column.
    adj_i8 = jnp.full((Np, Np), -1, jnp.int8).at[:N, :N].set(
        (adj > 0).astype(jnp.int8))

    # --- Kernel A: projection ---
    # NOTE: W / a1 / a2 are constant-index blocks (tiny); default 2-deep
    # buffering wastes only a few KiB so we skip pl.Buffered(1) for simplicity.
    est_a = (2 * (TQ * Fin * mm_bytes + Fin * Fp * mm_bytes + 2 * Fp * 4
                  + TQ * Fp * mm_bytes + 2 * TQ * 4)
             + 4 * TQ * Fp * 4)
    params_a = pltpu.CompilerParams(
        dimension_semantics=("parallel",),
        vmem_limit_bytes=_vmem_limit(2 * est_a))

    wh, wh1, wh2 = pl.pallas_call(
        _project_kernel,
        out_shape=(jax.ShapeDtypeStruct((Np, Fp), mm_dtype),
                   jax.ShapeDtypeStruct((Np, 1), f32),
                   jax.ShapeDtypeStruct((Np, 1), f32)),
        grid_spec=pltpu.PrefetchScalarGridSpec(
            num_scalar_prefetch=0,
            grid=(grid_rows,),
            in_specs=[
                pl.BlockSpec((TQ, Fin), lambda i: (i, 0)),
                pl.BlockSpec((Fin, Fp), lambda i: (0, 0)),
                pl.BlockSpec((1, Fp), lambda i: (0, 0)),
                pl.BlockSpec((1, Fp), lambda i: (0, 0)),
            ],
            out_specs=[
                pl.BlockSpec((TQ, Fp), lambda i: (i, 0)),
                pl.BlockSpec((TQ, 1), lambda i: (i, 0)),
                pl.BlockSpec((TQ, 1), lambda i: (i, 0)),
            ]),
        compiler_params=params_a,
    )(h_p, W_p, a1, a2)

    # (Np, 1) -> (1, Np) row vector so kernel B can slice lane-dense key blocks.
    # (Done in XLA: a few KiB of relayout, kept out of the kernels for safety.)
    wh2t = wh2.reshape(1, Np)

    kernel_b = functools.partial(
        _attention_kernel, alpha=float(alpha), concat=bool(concat),
        has_col_padding=bool(has_pad), ew_dtype=ew_dtype)

    # --- Kernel B: online-softmax attention + aggregation, (row, key) tiled ---
    est_b = (2 * (TQ * 4 + TK * 4 + TQ * TK * 1 + TK * Fp * mm_bytes
                  + TQ * Fp * 4)
             + TQ * Fp * 4 + 2 * TQ * 4
             + 6 * TQ * TK * ew_bytes)
    params_b = pltpu.CompilerParams(
        dimension_semantics=("parallel", "arbitrary"),
        vmem_limit_bytes=_vmem_limit(2 * est_b))

    out = pl.pallas_call(
        kernel_b,
        out_shape=jax.ShapeDtypeStruct((Np, Fp), f32),
        grid_spec=pltpu.PrefetchScalarGridSpec(
            num_scalar_prefetch=0,
            grid=(grid_rows, grid_keys),
            in_specs=[
                pl.BlockSpec((TQ, 1), lambda i, k: (i, 0)),    # wh1 row block
                pl.BlockSpec((1, TK), lambda i, k: (0, k)),    # wh2.T key block
                pl.BlockSpec((TQ, TK), lambda i, k: (i, k)),   # adj tile (int8)
                pl.BlockSpec((TK, Fp), lambda i, k: (k, 0)),   # Wh key block
            ],
            out_specs=pl.BlockSpec((TQ, Fp), lambda i, k: (i, 0)),
            scratch_shapes=[
                pltpu.VMEM((TQ, 1), f32),    # running max m
                pltpu.VMEM((TQ, 1), f32),    # running sum l
                pltpu.VMEM((TQ, Fp), f32),   # un-normalized accumulator
            ]),
        compiler_params=params_b,
    )(wh1, wh2t, adj_i8, wh)

    # TODO(synk): attention dropout is identity here (module run in eval mode).
    return out[:N, :Fout]


# ---------------------------------------------------------------------------
# Pure-JAX reference mirroring the PyTorch forward (eval mode)
# ---------------------------------------------------------------------------
def gat_reference(h, adj, W, a, *, alpha=0.2, concat=True):
    Fout = W.shape[1]
    Wh = h @ W
    Wh1 = Wh @ a[:Fout, :]
    Wh2 = Wh @ a[Fout:, :]
    e = Wh1 + Wh2.T
    e = jnp.where(e >= 0, e, alpha * e)
    att = jnp.where(adj > 0, e, jnp.float32(-2.0 ** 31))
    att = jax.nn.softmax(att, axis=1)
    h_prime = att @ Wh
    if concat:
        h_prime = jnp.where(h_prime > 0, h_prime, jnp.expm1(h_prime))
    return h_prime


def xavier_uniform(key, shape, gain=1.414):
    fan_in, fan_out = shape[0], shape[1]
    bound = gain * jnp.sqrt(6.0 / (fan_in + fan_out))
    return jax.random.uniform(key, shape, jnp.float32, -bound, bound)


def make_problem(key, N, Fin, Fout, density=0.2):
    k_h, k_adj, k_w, k_a = jax.random.split(key, 4)
    h = jax.random.normal(k_h, (N, Fin), jnp.float32)
    adj = (jax.random.uniform(k_adj, (N, N)) < density).astype(jnp.float32)
    adj = jnp.maximum(adj, jnp.eye(N, dtype=jnp.float32))  # self-loops
    W = xavier_uniform(k_w, (Fin, Fout))
    a = xavier_uniform(k_a, (2 * Fout, 1))
    return h, adj, W, a


if __name__ == "__main__":
    key = jax.random.PRNGKey(0)
    k1, k2, k3 = jax.random.split(key, 3)

    # Config 1: N=64, Fin=32, Fout=32, concat=True.
    h, adj, W, a = make_problem(k1, 64, 32, 32)
    ref = gat_reference(h, adj, W, a, alpha=0.2, concat=True)

    out_f32 = jax.block_until_ready(
        gat_layer(h, adj, W, a, alpha=0.2, concat=True, use_bf16=False))
    assert out_f32.shape == ref.shape
    assert jnp.allclose(out_f32, ref, atol=2e-2, rtol=2e-2), "f32 mismatch"

    out_bf16 = jax.block_until_ready(
        gat_layer(h, adj, W, a, alpha=0.2, concat=True, use_bf16=True))
    assert jnp.allclose(out_bf16, ref, atol=6e-2, rtol=6e-2), "bf16 mismatch"

    # Config 2: N=100, Fin=16, Fout=8, concat=False (row/col padding path).
    h2, adj2, W2, a2 = make_problem(k2, 100, 16, 8)
    ref2 = gat_reference(h2, adj2, W2, a2, alpha=0.2, concat=False)
    out2 = jax.block_until_ready(
        gat_layer(h2, adj2, W2, a2, alpha=0.2, concat=False, use_bf16=False))
    assert out2.shape == ref2.shape
    assert jnp.allclose(out2, ref2, atol=2e-2, rtol=2e-2), "padded-path mismatch"

    # Config 3: N=300 with key_tile=128 -> multi-key-block online softmax path.
    h3, adj3, W3, a3 = make_problem(k3, 300, 24, 32, density=0.05)
    ref3 = gat_reference(h3, adj3, W3, a3, alpha=0.2, concat=True)
    out3 = jax.block_until_ready(
        gat_layer(h3, adj3, W3, a3, alpha=0.2, concat=True, use_bf16=False,
                  key_tile=128))
    assert jnp.allclose(out3, ref3, atol=2e-2, rtol=2e-2), "online-softmax mismatch"

    # Config 4: bf16 elementwise chain (v6e/v7x VPU/EUP path), loose check.
    out4 = jax.block_until_ready(
        gat_layer(h, adj, W, a, alpha=0.2, concat=True, use_bf16=True,
                  ew_bf16=True))
    assert out4.shape == ref.shape
    assert float(jnp.max(jnp.abs(out4 - ref))) < 0.25, "ew-bf16 mismatch"

    print("KERNEL_OK")
</pallas_src>

<mosaic_0001>
module attributes {stable_mosaic.version = 11 : i64} {
  func.func @_project_kernel(%arg0: i32, %arg1: memref<32x32xf32, #tpu.memory_space<vmem>>, %arg2: memref<32x128xf32, #tpu.memory_space<vmem>>, %arg3: memref<1x128xf32, #tpu.memory_space<vmem>>, %arg4: memref<1x128xf32, #tpu.memory_space<vmem>>, %arg5: memref<32x128xf32, #tpu.memory_space<vmem>>, %arg6: memref<32x1xf32, #tpu.memory_space<vmem>>, %arg7: memref<32x1xf32, #tpu.memory_space<vmem>>) attributes {dimension_semantics = [#tpu.dimension_semantics<parallel>], iteration_bounds = array<i64: 4>, scalar_prefetch = 0 : i64, scratch_operands = 0 : i64, tpu.core_type = #tpu.core_type<tc>, window_params = [{transform_indices = @transform_0, window_bounds = array<i64: 32, 32>}, {pipeline_mode = #tpu.pipeline_mode<synchronous>, transform_indices = @transform_1, window_bounds = array<i64: 32, 128>}, {pipeline_mode = #tpu.pipeline_mode<synchronous>, transform_indices = @transform_2, window_bounds = array<i64: 1, 128>}, {pipeline_mode = #tpu.pipeline_mode<synchronous>, transform_indices = @transform_3, window_bounds = array<i64: 1, 128>}, {transform_indices = @transform_4, window_bounds = array<i64: 32, 128>}, {transform_indices = @transform_5, window_bounds = array<i64: 32, 1>}, {transform_indices = @transform_6, window_bounds = array<i64: 32, 1>}]} {
    %c0 = arith.constant 0 : index
    %c0_0 = arith.constant 0 : index
    %0 = vector.load %arg1[%c0, %c0_0] : memref<32x32xf32, #tpu.memory_space<vmem>>, vector<32x32xf32>
    %c0_1 = arith.constant 0 : index
    %c0_2 = arith.constant 0 : index
    %1 = vector.load %arg2[%c0_1, %c0_2] : memref<32x128xf32, #tpu.memory_space<vmem>>, vector<32x128xf32>
    %cst = arith.constant dense<0.000000e+00> : vector<32x128xf32>
    %2 = tpu.matmul %0, %1, %cst {dimension_numbers = #tpu.dot_dimension_numbers<[1], [0], [0], [1], [0, 0, 1, 1], [], []>} : vector<32x32xf32>, vector<32x128xf32>, vector<32x128xf32> -> vector<32x128xf32>
    %c0_3 = arith.constant 0 : index
    %c0_4 = arith.constant 0 : index
    %3 = vector.load %arg5[%c0_3, %c0_4] : memref<32x128xf32, #tpu.memory_space<vmem>>, vector<32x128xf32>
    tpu.vector_store %arg5[%c0_3, %c0_4], %2 {strides = array<i32>} : memref<32x128xf32, #tpu.memory_space<vmem>>, vector<32x128xf32>,
    %c0_5 = arith.constant 0 : index
    %c0_6 = arith.constant 0 : index
    %4 = vector.load %arg3[%c0_5, %c0_6] : memref<1x128xf32, #tpu.memory_space<vmem>>, vector<1x128xf32>
    %5 = vector.broadcast %4 : vector<1x128xf32> to vector<32x128xf32>
    %6 = arith.mulf %2, %5 : vector<32x128xf32>
    %cst_7 = arith.constant dense<0.000000e+00> : vector<32xf32>
    %7 = vector.multi_reduction <add>, %6, %cst_7 [1] : vector<32x128xf32> to vector<32xf32>
    %8 = vector.shape_cast %7 : vector<32xf32> to vector<32x1xf32>
    %c0_8 = arith.constant 0 : index
    %c0_9 = arith.constant 0 : index
    %9 = vector.load %arg6[%c0_8, %c0_9] : memref<32x1xf32, #tpu.memory_space<vmem>>, vector<32x1xf32>
    tpu.vector_store %arg6[%c0_8, %c0_9], %8 {strides = array<i32>} : memref<32x1xf32, #tpu.memory_space<vmem>>, vector<32x1xf32>,
    %c0_10 = arith.constant 0 : index
    %c0_11 = arith.constant 0 : index
    %10 = vector.load %arg4[%c0_10, %c0_11] : memref<1x128xf32, #tpu.memory_space<vmem>>, vector<1x128xf32>
    %11 = vector.broadcast %10 : vector<1x128xf32> to vector<32x128xf32>
    %12 = arith.mulf %2, %11 : vector<32x128xf32>
    %cst_12 = arith.constant dense<0.000000e+00> : vector<32xf32>
    %13 = vector.multi_reduction <add>, %12, %cst_12 [1] : vector<32x128xf32> to vector<32xf32>
    %14 = vector.shape_cast %13 : vector<32xf32> to vector<32x1xf32>
    %c0_13 = arith.constant 0 : index
    %c0_14 = arith.constant 0 : index
    %15 = vector.load %arg7[%c0_13, %c0_14] : memref<32x1xf32, #tpu.memory_space<vmem>>, vector<32x1xf32>
    tpu.vector_store %arg7[%c0_13, %c0_14], %14 {strides = array<i32>} : memref<32x1xf32, #tpu.memory_space<vmem>>, vector<32x1xf32>,
    return
  }
  func.func @transform_0(%arg0: i32) -> (i32, i32) {
    %c0_i32 = arith.constant 0 : i32
    %c0_i32_0 = arith.constant 0 : i32
    return %arg0, %c0_i32 : i32, i32
  }
  func.func @transform_1(%arg0: i32) -> (i32, i32) {
    %c0_i32 = arith.constant 0 : i32
    %c0_i32_0 = arith.constant 0 : i32
    %c0_i32_1 = arith.constant 0 : i32
    return %c0_i32, %c0_i32_0 : i32, i32
  }
  func.func @transform_2(%arg0: i32) -> (i32, i32) {
    %c0_i32 = arith.constant 0 : i32
    %c0_i32_0 = arith.constant 0 : i32
    %c0_i32_1 = arith.constant 0 : i32
    return %c0_i32, %c0_i32_0 : i32, i32
  }
  func.func @transform_3(%arg0: i32) -> (i32, i32) {
    %c0_i32 = arith.constant 0 : i32
    %c0_i32_0 = arith.constant 0 : i32
    %c0_i32_1 = arith.constant 0 : i32
    return %c0_i32, %c0_i32_0 : i32, i32
  }
  func.func @transform_4(%arg0: i32) -> (i32, i32) {
    %c0_i32 = arith.constant 0 : i32
    %c0_i32_0 = arith.constant 0 : i32
    return %arg0, %c0_i32 : i32, i32
  }
  func.func @transform_5(%arg0: i32) -> (i32, i32) {
    %c0_i32 = arith.constant 0 : i32
    %c0_i32_0 = arith.constant 0 : i32
    return %arg0, %c0_i32 : i32, i32
  }
  func.func @transform_6(%arg0: i32) -> (i32, i32) {
    %c0_i32 = arith.constant 0 : i32
    %c0_i32_0 = arith.constant 0 : i32
    return %arg0, %c0_i32 : i32, i32
  }
}

</mosaic_0001>

<llo_original>
// kernel: tpu_custom_call.1
$region0: #{tpu_custom_call.1}
  #allocation0 [shape = 'u32[]', space=smem, size = 0x4, offset = 0x4, fixed_abs, tag = 'smem constant byte address 0x4 - core index']
  #allocation1 [shape = 'u32[144,128]{1,0:T(1,128)}', space=vmem, size = 0x12000, scoped, tag = 'internal scratch']
  %s0 = inlined_call_operand.vmem [shape: f32[128,32], index: 0, kind: input, shape index: {}]
  %s1 = inlined_call_operand.vmem [shape: f32[32,128], index: 1, kind: input, shape index: {}]
  %s2 = inlined_call_operand.vmem [shape: f32[1,128], index: 2, kind: input, shape index: {}]
  %s3 = inlined_call_operand.vmem [shape: f32[1,128], index: 3, kind: input, shape index: {}]
  %s4 = inlined_call_operand.hbm [shape: f32[128,128], index: 4, kind: output, shape index: {0}]
  %s5 = inlined_call_operand.vmem [shape: f32[128,1], index: 5, kind: output, shape index: {1}]
  %s6 = inlined_call_operand.vmem [shape: f32[128,1], index: 6, kind: output, shape index: {2}]
  %7 = xla_tuple %s4, %s5, %s6
  %s8 = sld [smem:[#allocation0]]
  $region65: #{tpu_custom_call.1} parent=0
    _
  %s10 = ssub.s32 1, %s8
  %s11 = scalar_select 0, %s10, %s8
  $region1: #{tpu_custom_call.1} parent=0
    #allocation2 [shape = 'u8[32768]{0}', space=vmem, size = 0x8000, scoped, tag = 'output window, operand 0']
    #allocation3 [shape = 's32[2]{0}', space=sflag, size = 0x8, scoped, tag = 'scoped memory for tpu_custom_call.1']
    %12 = vsyncpa [#allocation3], 0
    %s13 = scalar_lea.sflag [#allocation3], 1
    %14 = vsyncpa %s13, 0
    loop: start=0, step=1, limit=6
    $region2: #{tpu_custom_call.1} parent=1 // loop_pre_header
      _
    $region3: #{tpu_custom_call.1} parent=1 // loop_header
      %s16 = sphi 0, %s20
      %p17 = scmp.ge.s32.totalorder %s16, 6
      %s26 = sphi 0, %s28
      %s29 = sphi 0, %s26
      %s30 = sphi 0, %s29
      %s46 = sphi 0, %s30
      %s50 = sphi 0, %s50
      %s52 = sphi 0, %s50
      %s53 = sphi 0, %s52
      %s67 = sphi 0, %s53
      %s71 = sphi 0, %s71
      %s73 = sphi 0, %s71
      %s74 = sphi 0, %s73
      %s88 = sphi 0, %s74
      %s92 = sphi 0, %s92
      %s94 = sphi 0, %s92
      %s95 = sphi 0, %s94
      %s109 = sphi 0, %s95
      %s115 = sphi 0, %s117
      %s118 = sphi 0, %s115
      %s119 = sphi 0, %s118
      %s135 = sphi 0, %s119
      %s141 = sphi 0, %s143
      %s144 = sphi 0, %s141
      %s145 = sphi 0, %s144
      %s161 = sphi 0, %s145
      %s167 = sphi 0, %s169
      %s170 = sphi 0, %s167
      %s171 = sphi 0, %s170
      %s187 = sphi 0, %s171
    $region4: #{tpu_custom_call.1} parent=1 // loop_header_branch
      %19 = sbr.rel (%p17) target = $region8
    $region5: #{tpu_custom_call.1} parent=1 // loop_body
      %s21 = ssub.s32 %s16, 1
      %s22 = ssub.s32 %s16, 2
      %s23 = sadd.s32 %s16, 1
      %s24 = ssub.s32 %s16, %s23
      %p25 = scmp.eq.s32.totalorder %s24, 0
      %s27 = sadd.s32 %s26, 1
      %s28 = scalar_select %p25, %s26, %s27
      %p31 = pneg %p25
      %p32 = scmp.eq.s32.totalorder %s16, 3
      %p33 = por %p31, %p32
      %p34 = scmp.ne.s32.totalorder %s26, %s29
      %p35 = scmp.eq.s32.totalorder %s16, 0
      %p36 = por %p34, %p35
      %p37 = scmp.ne.s32.totalorder %s26, %s29
      %p38 = scmp.eq.s32.totalorder %s21, 3
      %p39 = por %p37, %p38
      %p40 = scmp.ne.s32.totalorder %s29, %s30
      %p41 = scmp.eq.s32.totalorder %s21, 0
      %p42 = por %p40, %p41
      %p43 = scmp.ne.s32.totalorder %s29, %s30
      %p44 = scmp.eq.s32.totalorder %s22, 3
      %p45 = por %p43, %p44
      %p47 = scmp.ne.s32.totalorder %s30, %s46
      %p48 = scmp.eq.s32.totalorder %s22, 0
      %p49 = por %p47, %p48
      %s51 = sadd.s32 %s50, 1
      %p54 = scmp.eq.s32.totalorder %s16, 3
      %p55 = scmp.ne.s32.totalorder %s50, %s52
      %p56 = scmp.eq.s32.totalorder %s16, 0
      %p57 = por %p55, %p56
      %p58 = scmp.ne.s32.totalorder %s50, %s52
      %p59 = scmp.eq.s32.totalorder %s21, 3
      %p60 = por %p58, %p59
      %p61 = scmp.ne.s32.totalorder %s52, %s53
      %p62 = scmp.eq.s32.totalorder %s21, 0
      %p63 = por %p61, %p62
      %p64 = scmp.ne.s32.totalorder %s52, %s53
      %p65 = scmp.eq.s32.totalorder %s22, 3
      %p66 = por %p64, %p65
      %p68 = scmp.ne.s32.totalorder %s53, %s67
      %p69 = scmp.eq.s32.totalorder %s22, 0
      %p70 = por %p68, %p69
      %s72 = sadd.s32 %s71, 1
      %p75 = scmp.eq.s32.totalorder %s16, 3
      %p76 = scmp.ne.s32.totalorder %s71, %s73
      %p77 = scmp.eq.s32.totalorder %s16, 0
      %p78 = por %p76, %p77
      %p79 = scmp.ne.s32.totalorder %s71, %s73
      %p80 = scmp.eq.s32.totalorder %s21, 3
      %p81 = por %p79, %p80
      %p82 = scmp.ne.s32.totalorder %s73, %s74
      %p83 = scmp.eq.s32.totalorder %s21, 0
      %p84 = por %p82, %p83
      %p85 = scmp.ne.s32.totalorder %s73, %s74
      %p86 = scmp.eq.s32.totalorder %s22, 3
      %p87 = por %p85, %p86
      %p89 = scmp.ne.s32.totalorder %s74, %s88
      %p90 = scmp.eq.s32.totalorder %s22, 0
      %p91 = por %p89, %p90
      %s93 = sadd.s32 %s92, 1
      %p96 = scmp.eq.s32.totalorder %s16, 3
      %p97 = scmp.ne.s32.totalorder %s92, %s94
      %p98 = scmp.eq.s32.totalorder %s16, 0
      %p99 = por %p97, %p98
      %p100 = scmp.ne.s32.totalorder %s92, %s94
      %p101 = scmp.eq.s32.totalorder %s21, 3
      %p102 = por %p100, %p101
      %p103 = scmp.ne.s32.totalorder %s94, %s95
      %p104 = scmp.eq.s32.totalorder %s21, 0
      %p105 = por %p103, %p104
      %p106 = scmp.ne.s32.totalorder %s94, %s95
      %p107 = scmp.eq.s32.totalorder %s22, 3
      %p108 = por %p106, %p107
      %p110 = scmp.ne.s32.totalorder %s95, %s109
      %p111 = scmp.eq.s32.totalorder %s22, 0
      %p112 = por %p110, %p111
      %s113 = ssub.s32 %s16, %s23
      %p114 = scmp.eq.s32.totalorder %s113, 0
      %s116 = sadd.s32 %s115, 1
      %s117 = scalar_select %p114, %s115, %s116
      %p120 = pneg %p114
      %p121 = scmp.eq.s32.totalorder %s16, 3
      %p122 = por %p120, %p121
      %p123 = scmp.ne.s32.totalorder %s115, %s118
      %p124 = scmp.eq.s32.totalorder %s16, 0
      %p125 = por %p123, %p124
      %p126 = scmp.ne.s32.totalorder %s115, %s118
      %p127 = scmp.eq.s32.totalorder %s21, 3
      %p128 = por %p126, %p127
      %p129 = scmp.ne.s32.totalorder %s118, %s119
      %p130 = scmp.eq.s32.totalorder %s21, 0
      %p131 = por %p129, %p130
      %p132 = scmp.ne.s32.totalorder %s118, %s119
      %p133 = scmp.eq.s32.totalorder %s22, 3
      %p134 = por %p132, %p133
      %p136 = scmp.ne.s32.totalorder %s119, %s135
      %p137 = scmp.eq.s32.totalorder %s22, 0
      %p138 = por %p136, %p137
      %s139 = ssub.s32 %s16, %s23
      %p140 = scmp.eq.s32.totalorder %s139, 0
      %s142 = sadd.s32 %s141, 1
      %s143 = scalar_select %p140, %s141, %s142
      %p146 = pneg %p140
      %p147 = scmp.eq.s32.totalorder %s16, 3
      %p148 = por %p146, %p147
      %p149 = scmp.ne.s32.totalorder %s141, %s144
      %p150 = scmp.eq.s32.totalorder %s16, 0
      %p151 = por %p149, %p150
      %p152 = scmp.ne.s32.totalorder %s141, %s144
      %p153 = scmp.eq.s32.totalorder %s21, 3
      %p154 = por %p152, %p153
      %p155 = scmp.ne.s32.totalorder %s144, %s145
      %p156 = scmp.eq.s32.totalorder %s21, 0
      %p157 = por %p155, %p156
      %p158 = scmp.ne.s32.totalorder %s144, %s145
      %p159 = scmp.eq.s32.totalorder %s22, 3
      %p160 = por %p158, %p159
      %p162 = scmp.ne.s32.totalorder %s145, %s161
      %p163 = scmp.eq.s32.totalorder %s22, 0
      %p164 = por %p162, %p163
      %s165 = ssub.s32 %s16, %s23
      %p166 = scmp.eq.s32.totalorder %s165, 0
      %s168 = sadd.s32 %s167, 1
      %s169 = scalar_select %p166, %s167, %s168
      %p172 = pneg %p166
      %p173 = scmp.eq.s32.totalorder %s16, 3
      %p174 = por %p172, %p173
      %p175 = scmp.ne.s32.totalorder %s167, %s170
      %p176 = scmp.eq.s32.totalorder %s16, 0
      %p177 = por %p175, %p176
      %p178 = scmp.ne.s32.totalorder %s167, %s170
      %p179 = scmp.eq.s32.totalorder %s21, 3
      %p180 = por %p178, %p179
      %p181 = scmp.ne.s32.totalorder %s170, %s171
      %p182 = scmp.eq.s32.totalorder %s21, 0
      %p183 = por %p181, %p182
      %p184 = scmp.ne.s32.totalorder %s170, %s171
      %p185 = scmp.eq.s32.totalorder %s22, 3
      %p186 = por %p184, %p185
      %p188 = scmp.ne.s32.totalorder %s171, %s187
      %p189 = scmp.eq.s32.totalorder %s22, 0
      %p190 = por %p188, %p189
      %p191 = scmp.le.s32.totalorder 1, %s16
      %p192 = scmp.lt.s32.totalorder %s16, 5
      %p193 = pnand %p191, %p192
      %p194 = pneg %p193
      // Predicated region
      $region9: #{tpu_custom_call.1} parent=5 // pred_check
        _
      $region10: #{tpu_custom_call.1} parent=5 // pred_check_branch
        %196 = sbr.rel (%p193) target = $region12
      $region11: #{tpu_custom_call.1} parent=5 // pred_region
        %s197 = ssub.s32 %s16, 1
        // Predicated region
        $region13: #{tpu_custom_call.1} parent=11 // pred_check
          %p198 = pneg %p63
        $region14: #{tpu_custom_call.1} parent=11 // pred_check_branch
          %200 = sbr.rel (%p198) target = $region16
        $region15: #{tpu_custom_call.1} parent=11 // pred_region
          _
        $region16: #{tpu_custom_call.1} parent=11 // pred_fallthru
          _
        // Predicated region
        $region17: #{tpu_custom_call.1} parent=11 // pred_check
          %p201 = pneg %p84
        $region18: #{tpu_custom_call.1} parent=11 // pred_check_branch
          %203 = sbr.rel (%p201) target = $region20
        $region19: #{tpu_custom_call.1} parent=11 // pred_region
          _
        $region20: #{tpu_custom_call.1} parent=11 // pred_fallthru
          _
        // Predicated region
        $region21: #{tpu_custom_call.1} parent=11 // pred_check
          %p204 = pneg %p105
        $region22: #{tpu_custom_call.1} parent=11 // pred_check_branch
          %206 = sbr.rel (%p204) target = $region24
        $region23: #{tpu_custom_call.1} parent=11 // pred_region
          _
        $region24: #{tpu_custom_call.1} parent=11 // pred_fallthru
          _
      $region12: #{tpu_custom_call.1} parent=5 // pred_fallthru
        _
      %p207 = scmp.lt.s32.totalorder %s16, 4
      // Predicated region
      $region25: #{tpu_custom_call.1} parent=5 // pred_check
        %p208 = pneg %p207
      $region26: #{tpu_custom_call.1} parent=5 // pred_check_branch
        %210 = sbr.rel (%p208) target = $region28
      $region27: #{tpu_custom_call.1} parent=5 // pred_region
        // Predicated region
        $region29: #{tpu_custom_call.1} parent=27 // pred_check
          %p211 = pneg %p36
        $region30: #{tpu_custom_call.1} parent=27 // pred_check_branch
          %213 = sbr.rel (%p211) target = $region32
        $region31: #{tpu_custom_call.1} parent=27 // pred_region
          %s214 = smul.u32 4, %s16
          %p215 = scmp.lt.s32.totalorder %s214, 15
          %s216 = scalar_select %p215, %s214, 15
          %s217 = smul.addr %s216, 8
          %s218 = scalar_lea.vmem %s0, %s217
          %s219 = smul.u32 4, %s16
        $region32: #{tpu_custom_call.1} parent=27 // pred_fallthru
          _
      $region28: #{tpu_custom_call.1} parent=5 // pred_fallthru
        _
      %p220 = scmp.le.s32.totalorder 1, %s16
      %p221 = scmp.lt.s32.totalorder %s16, 5
      %p222 = pnand %p220, %p221
      %p223 = pneg %p222
      // Predicated region
      $region33: #{tpu_custom_call.1} parent=5 // pred_check
        _
      $region34: #{tpu_custom_call.1} parent=5 // pred_check_branch
        %225 = sbr.rel (%p222) target = $region36
      $region35: #{tpu_custom_call.1} parent=5 // pred_region
        %s226 = ssub.s32 %s16, 1
        %s227 = smul.u32 4, %s21
        %p228 = scmp.lt.s32.totalorder %s227, 15
        %s229 = scalar_select %p228, %s227, 15
        %s230 = smul.addr %s229, 8
        %s231 = scalar_lea.vmem %s0, %s230
        %p232 = pneg %p42
        %p233 = pneg %p39
        %p234 = pneg %p63
        %p235 = pneg %p60
        %p236 = pneg %p84
        %p237 = pneg %p81
        %p238 = pneg %p105
        %p239 = pneg %p102
        %p240 = pneg %p131
        %p241 = pneg %p128
        %s242 = sand.u32 %s118, 1
        %s243 = scalar_lea.sflag [#allocation3], %s242
        %s244 = sand.u32 %s118, 1
        %s245 = smul.addr %s244, 32
        %s246 = scalar_lea.vmem [#allocation2], %s245
        %p247 = pneg %p157
        %p248 = pneg %p154
        %s249 = smul.u32 4, %s21
        %p250 = scmp.lt.s32.totalorder %s249, 15
        %s251 = scalar_select %p250, %s249, 15
        %s252 = smul.addr %s251, 8
        %s253 = scalar_lea.vmem %s5, %s252
        %p254 = pneg %p183
        %p255 = pneg %p180
        %s256 = smul.u32 4, %s21
        %p257 = scmp.lt.s32.totalorder %s256, 15
        %s258 = scalar_select %p257, %s256, 15
        %s259 = smul.addr %s258, 8
        %s260 = scalar_lea.vmem %s6, %s259
        %s261 = smul.u32 4, %s21
        %p262 = scmp.lt.s32.totalorder %s261, 15
        %s263 = scalar_select %p262, %s261, 15
        %s264 = smul.addr %s263, 8
        %s265 = scalar_lea.vmem %s0, %s264
        %s266 = smul.u32 4, %s21
        %s267 = smul.u32 4, %s21
        %s268 = smul.u32 4, %s21
        %p269 = scmp.lt.s32.totalorder %s268, 15
        %s270 = scalar_select %p269, %s268, 15
        %s271 = smul.addr %s270, 8
        %s272 = scalar_lea.vmem %s5, %s271
        %s273 = smul.u32 4, %s21
        %s274 = smul.u32 4, %s21
        %p275 = scmp.lt.s32.totalorder %s274, 15
        %s276 = scalar_select %p275, %s274, 15
        %s277 = smul.addr %s276, 8
        %s278 = scalar_lea.vmem %s6, %s277
        %s279 = smul.u32 4, %s21
        %v280 = vld [vmem:[%s265] sm:$0xff]
        %v281 = vld [vmem:[%s265 + $0x8] sm:$0xff]
        %v282 = vld [vmem:[%s265 + $0x10] sm:$0xff]
        %v283 = vld [vmem:[%s265 + $0x18] sm:$0xff]
        %v284 = vld [vmem:[%s1] sm:$0xff]
        %v285 = vld [vmem:[%s1 + $0x8] sm:$0xff]
        %v286 = vld [vmem:[%s1 + $0x10] sm:$0xff]
        %v287 = vld [vmem:[%s1 + $0x18] sm:$0xff]
        %vm288 = vcmask 261120
        %v290 = vsel %vm288, %v280, 0
        %v293 = vsel %vm288, %v281, 0
        %v296 = vsel %vm288, %v282, 0
        %v299 = vsel %vm288, %v283, 0
        %301 = vmatprep.subr.mxu0 0.0
        %302 = vmatpush1.msra.mxu0 0.0
        %303 = vmatprep.subr.mxu0 0.0
        %304 = vmatpush1.msra.mxu0 0.0
        %305 = vmatprep.subr.mxu0 0.0
        %306 = vmatpush1.msra.mxu0 0.0
        %307 = vmatprep.subr.mxu0 0.0
        %308 = vmatpush1.msra.mxu0 0.0
        %309 = vmatprep.subr.mxu0 0.0
        %310 = vmatpush1.msra.mxu0 0.0
        %311 = vmatprep.subr.mxu0 0.0
        %312 = vmatpush1.msra.mxu0 0.0
        %313 = vmatprep.subr.mxu0 0.0
        %314 = vmatpush1.msra.mxu0 0.0
        %315 = vmatprep.subr.mxu0 0.0
        %316 = vmatpush1.msra.mxu0 0.0
        %317 = vmatprep.subr.mxu0 0.0
        %318 = vmatpush1.msra.mxu0 0.0
        %319 = vmatprep.subr.mxu0 0.0
        %320 = vmatpush1.msra.mxu0 0.0
        %321 = vmatprep.subr.mxu0 0.0
        %322 = vmatpush1.msra.mxu0 0.0
        %323 = vmatprep.subr.mxu0 0.0
        %324 = vmatpush1.msra.mxu0 0.0
        %325 = vmatprep.subr.mxu0 0.0
        %326 = vmatpush1.msra.mxu0 %v287
        %327 = vmatprep.subr.mxu0 0.0
        %328 = vmatpush1.msra.mxu0 %v286
        %329 = vmatprep.subr.mxu0 0.0
        %330 = vmatpush1.msra.mxu0 %v285
        %331 = vmatprep.subr.mxu0 0.0
        %332 = vmatpush1.msra.mxu0 %v284
        %333 = vmatprep.subr.mxu0 0.0
        %334 = vmatpush2.msra.mxu0 0.0
        %335 = vmatprep.subr.mxu0 0.0
        %336 = vmatpush2.msra.mxu0 0.0
        %337 = vmatprep.subr.mxu0 0.0
        %338 = vmatpush2.msra.mxu0 0.0
        %339 = vmatprep.subr.mxu0 0.0
        %340 = vmatpush2.msra.mxu0 0.0
        %341 = vmatprep.subr.mxu0 0.0
        %342 = vmatpush2.msra.mxu0 0.0
        %343 = vmatprep.subr.mxu0 0.0
        %344 = vmatpush2.msra.mxu0 0.0
        %345 = vmatprep.subr.mxu0 0.0
        %346 = vmatpush2.msra.mxu0 0.0
        %347 = vmatprep.subr.mxu0 0.0
        %348 = vmatpush2.msra.mxu0 0.0
        %349 = vmatprep.subr.mxu0 0.0
        %350 = vmatpush2.msra.mxu0 0.0
        %351 = vmatprep.subr.mxu0 0.0
        %352 = vmatpush2.msra.mxu0 0.0
        %353 = vmatprep.subr.mxu0 0.0
        %354 = vmatpush2.msra.mxu0 0.0
        %355 = vmatprep.subr.mxu0 0.0
        %356 = vmatpush2.msra.mxu0 0.0
        %357 = vmatprep.subr.mxu0 0.0
        %358 = vmatpush2.msra.mxu0 0.0
        %359 = vmatprep.subr.mxu0 0.0
        %360 = vmatpush2.msra.mxu0 0.0
        %361 = vmatprep.subr.mxu0 0.0
        %362 = vmatpush2.msra.mxu0 0.0
        %363 = vmatprep.subr.mxu0 0.0
        %364 = vmatpush2.msra.mxu0 0.0
        %365 = vmatprep.mubr.f32.mxu0 0.0
        %366 = vmatmul.mubr.f32.gmra.mxu0 %v290
        %v367 = vpop.f32.mrf.mxu0
        %v368 = vadd.f32 0.0, %v367
        %v369 = vpop.f32.mrf.mxu0
        %370 = vmatprep.mubr.f32.mxu0 0.0
        %371 = vmatmul.mubr.f32.gmra.mxu0 %v293
        %v372 = vpop.f32.mrf.mxu0
        %v373 = vadd.f32 0.0, %v372
        %v374 = vpop.f32.mrf.mxu0
        %375 = vmatprep.mubr.f32.mxu0 0.0
        %376 = vmatmul.mubr.f32.gmra.mxu0 %v296
        %v377 = vpop.f32.mrf.mxu0
        %v378 = vadd.f32 0.0, %v377
        %v379 = vpop.f32.mrf.mxu0
        %380 = vmatprep.mubr.f32.mxu0 0.0
        %381 = vmatmul.mubr.f32.gmra.mxu0 %v299
        %v382 = vpop.f32.mrf.mxu0
        %v383 = vadd.f32 0.0, %v382
        %v384 = vpop.f32.mrf.mxu0
        %385 = vdwg.mxu0
        %386 = vst [vmem:[%s246] sm:$0xff] %v368
        %387 = vst [vmem:[%s246 + $0x8] sm:$0xff] %v373
        %388 = vst [vmem:[%s246 + $0x10] sm:$0xff] %v378
        %389 = vst [vmem:[%s246 + $0x18] sm:$0xff] %v383
        %v390 = vld [vmem:[%s2] sm:$0x1]
        %v392 = vlaneseq
        %v393 = vshrl.u32 %v392, 7
        %v394 = vsub.s32 0, %v393
        %v395 = vrot.slane %v390, %v394
        %v397 = vmul.f32 %v368, %v395
        %v398 = vmul.f32 %v373, %v395
        %v399 = vmul.f32 %v378, %v395
        %v400 = vmul.f32 %v383, %v395
        %401 = vadd.xlane.f32.xlu0 %v397
        %v402 = vpop.xlane.xlu0 %401
        %403 = vadd.xlane.f32.xlu0 %v398
        %v404 = vpop.xlane.xlu0 %403
        %405 = vadd.xlane.f32.xlu0 %v399
        %v406 = vpop.xlane.xlu0 %405
        %407 = vadd.xlane.f32.xlu0 %v400
        %v408 = vpop.xlane.xlu0 %407
        %vm409 = vcmask 7168
        %410 = vst.msk [vmem:[%s272] sm:$0xff] %vm409, %v402
        %411 = vst.msk [vmem:[%s272 + $0x8] sm:$0xff] %vm409, %v404
        %412 = vst.msk [vmem:[%s272 + $0x10] sm:$0xff] %vm409, %v406
        %413 = vst.msk [vmem:[%s272 + $0x18] sm:$0xff] %vm409, %v408
        %v414 = vld [vmem:[%s3] sm:$0x1]
        %v416 = vlaneseq
        %v417 = vshrl.u32 %v416, 7
        %v418 = vsub.s32 0, %v417
        %v419 = vrot.slane %v414, %v418
        %v421 = vmul.f32 %v368, %v419
        %v422 = vmul.f32 %v373, %v419
        %v423 = vmul.f32 %v378, %v419
        %v424 = vmul.f32 %v383, %v419
        %425 = vadd.xlane.f32.xlu0 %v421
        %v426 = vpop.xlane.xlu0 %425
        %427 = vadd.xlane.f32.xlu0 %v422
        %v428 = vpop.xlane.xlu0 %427
        %429 = vadd.xlane.f32.xlu0 %v423
        %v430 = vpop.xlane.xlu0 %429
        %431 = vadd.xlane.f32.xlu0 %v424
        %v432 = vpop.xlane.xlu0 %431
        %433 = vst.msk [vmem:[%s278] sm:$0xff] %vm409, %v426
        %434 = vst.msk [vmem:[%s278 + $0x8] sm:$0xff] %vm409, %v428
        %435 = vst.msk [vmem:[%s278 + $0x10] sm:$0xff] %vm409, %v430
        %436 = vst.msk [vmem:[%s278 + $0x18] sm:$0xff] %vm409, %v432
        %s437 = sand.u32 %s118, 1
        %s438 = scalar_lea.sflag [#allocation3], %s437
        %s439 = sand.u32 %s118, 1
        %s440 = smul.addr %s439, 32
        %s441 = scalar_lea.vmem [#allocation2], %s440
        %s442 = smul.u32 4, %s21
        %p443 = scmp.lt.s32.totalorder %s442, 15
        %s444 = scalar_select %p443, %s442, 15
        %s445 = smul.addr %s444, 8
        %s446 = scalar_lea.vmem %s5, %s445
        %s447 = smul.u32 4, %s21
        %p448 = scmp.lt.s32.totalorder %s447, 15
        %s449 = scalar_select %p448, %s447, 15
        %s450 = smul.addr %s449, 8
        %s451 = scalar_lea.vmem %s6, %s450
        // Predicated region
        $region37: #{tpu_custom_call.1} parent=35 // pred_check
          %p452 = pneg %p128
        $region38: #{tpu_custom_call.1} parent=35 // pred_check_branch
          %454 = sbr.rel (%p452) target = $region40
        $region39: #{tpu_custom_call.1} parent=35 // pred_region
          %s455 = smul.u32 4, %s21
          %s457 = ssub.s32 512, 512
          %458 = vsyncadd %s438, %s457
          %s459 = smul.addr %s455, 128
          %s460 = scalar_lea.hbm %s4, %s459
          %s461 = sshll.u32 %s441, 4
          %s462 = int_to_ptr.vmem [resolvable:$true] %s461
          %467 = dma.vmem_to_hbm [thread:$0]  %s462, 512, %s460, %s438, 128, 128, 8
        $region40: #{tpu_custom_call.1} parent=35 // pred_fallthru
          _
        // Predicated region
        $region41: #{tpu_custom_call.1} parent=35 // pred_check
          %p468 = pneg %p154
        $region42: #{tpu_custom_call.1} parent=35 // pred_check_branch
          %470 = sbr.rel (%p468) target = $region44
        $region43: #{tpu_custom_call.1} parent=35 // pred_region
          %s471 = smul.u32 4, %s21
        $region44: #{tpu_custom_call.1} parent=35 // pred_fallthru
          _
        // Predicated region
        $region45: #{tpu_custom_call.1} parent=35 // pred_check
          %p472 = pneg %p180
        $region46: #{tpu_custom_call.1} parent=35 // pred_check_branch
          %474 = sbr.rel (%p472) target = $region48
        $region47: #{tpu_custom_call.1} parent=35 // pred_region
          %s475 = smul.u32 4, %s21
        $region48: #{tpu_custom_call.1} parent=35 // pred_fallthru
          _
      $region36: #{tpu_custom_call.1} parent=5 // pred_fallthru
        _
      %p476 = scmp.le.s32.totalorder 2, %s16
      // Predicated region
      $region49: #{tpu_custom_call.1} parent=5 // pred_check
        %p477 = pneg %p476
      $region50: #{tpu_custom_call.1} parent=5 // pred_check_branch
        %479 = sbr.rel (%p477) target = $region52
      $region51: #{tpu_custom_call.1} parent=5 // pred_region
        %s480 = ssub.s32 %s16, 2
        // Predicated region
        $region53: #{tpu_custom_call.1} parent=51 // pred_check
          %p481 = pneg %p134
        $region54: #{tpu_custom_call.1} parent=51 // pred_check_branch
          %483 = sbr.rel (%p481) target = $region56
        $region55: #{tpu_custom_call.1} parent=51 // pred_region
          %s484 = sand.u32 %s119, 1
          %s485 = scalar_lea.sflag [#allocation3], %s484
          %s486 = sand.u32 %s119, 1
          %s487 = smul.addr %s486, 32
          %s488 = scalar_lea.vmem [#allocation2], %s487
          %489 = dma.done %s485, 512
        $region56: #{tpu_custom_call.1} parent=51 // pred_fallthru
          _
        // Predicated region
        $region57: #{tpu_custom_call.1} parent=51 // pred_check
          %p490 = pneg %p160
        $region58: #{tpu_custom_call.1} parent=51 // pred_check_branch
          %492 = sbr.rel (%p490) target = $region60
        $region59: #{tpu_custom_call.1} parent=51 // pred_region
          %s493 = smul.u32 4, %s22
          %p494 = scmp.lt.s32.totalorder %s493, 15
          %s495 = scalar_select %p494, %s493, 15
          %s496 = smul.addr %s495, 8
          %s497 = scalar_lea.vmem %s5, %s496
        $region60: #{tpu_custom_call.1} parent=51 // pred_fallthru
          _
        // Predicated region
        $region61: #{tpu_custom_call.1} parent=51 // pred_check
          %p498 = pneg %p186
        $region62: #{tpu_custom_call.1} parent=51 // pred_check_branch
          %500 = sbr.rel (%p498) target = $region64
        $region63: #{tpu_custom_call.1} parent=51 // pred_region
          %s501 = smul.u32 4, %s22
          %p502 = scmp.lt.s32.totalorder %s501, 15
          %s503 = scalar_select %p502, %s501, 15
          %s504 = smul.addr %s503, 8
          %s505 = scalar_lea.vmem %s6, %s504
        $region64: #{tpu_custom_call.1} parent=51 // pred_fallthru
          _
      $region52: #{tpu_custom_call.1} parent=5 // pred_fallthru
        _
    $region6: #{tpu_custom_call.1} parent=1 // loop_footer
      %s20 = sadd.s32 1, %s16
    $region7: #{tpu_custom_call.1} parent=1 // loop_footer_branch
      %15 = sbr.rel target = $region3
    $region8: #{tpu_custom_call.1} parent=1 // loop_exit
      _
    %506 = vsyncpa [#allocation3], 1
    %s507 = scalar_lea.sflag [#allocation3], 1
    %508 = vsyncpa %s507, 1

</llo_original>
